<compile_context>
chip_gen: v5e
topology: v5e:2x2
jax: 0.10.0
libtpu: 0.0.40
codegen_flags: <defaults>
</compile_context>

<pallas_src>
import functools

import jax
import jax.numpy as jnp
from jax.experimental import pallas as pl
from jax.experimental.pallas import tpu as pltpu


_LANE = 128
_EPS = 1e-12   # guards 1/||diff|| in the analytic gradient (torch ref has the same latent issue)
_VMEM_LIMIT = 32 * 1024 * 1024  # safe on v5e/v6e (128 MiB phys) and v7x (64 MiB phys)


# --------------------------------------------------------------------------- #
# Kernels
# --------------------------------------------------------------------------- #
def _accumulate_sqdist(x_ref, g_ref):
    """sum_d (x[:, d, :] - g[:, d])**2 -> [BT, H] f32, accumulated on the VPU."""
    bt, d_dim, h = x_ref.shape
    g = g_ref[...].astype(jnp.float32)                 # [BT, D]
    sq = jnp.zeros((bt, h), dtype=jnp.float32)
    for d in range(d_dim):                             # D is small & static: unrolled
        diff = x_ref[:, d, :].astype(jnp.float32) - g[:, d][:, None]
        sq = sq + diff * diff
    return sq, g


def _value_kernel(x_ref, g_ref, out_ref):
    # x_ref: [BT, D, H], g_ref: [BT, D], out_ref: [1, BT] (lane-dense output)
    sq, _ = _accumulate_sqdist(x_ref, g_ref)
    dist = -jnp.sqrt(sq)                               # EUP
    out_ref[...] = jnp.sum(jnp.exp(dist), axis=-1)[None, :]


def _value_grad_kernel(x_ref, g_ref, out_ref, grad_ref):
    # Fused forward + analytic gradient (single pass over x).
    # grad[b, d, h] = -exp(-||diff_bh||) * diff[b, d, h] / ||diff_bh||
    sq, g = _accumulate_sqdist(x_ref, g_ref)
    norm = jnp.sqrt(sq)                                # [BT, H]
    e = jnp.exp(-norm)
    out_ref[...] = jnp.sum(e, axis=-1)[None, :]
    scale = -(e / jnp.maximum(norm, _EPS))             # [BT, H]
    d_dim = x_ref.shape[1]
    for d in range(d_dim):                             # recompute diff: cheap VPU work,
        diff = x_ref[:, d, :].astype(jnp.float32) - g[:, d][:, None]   # keeps vreg pressure low
        grad_ref[:, d, :] = (scale * diff).astype(grad_ref.dtype)


# --------------------------------------------------------------------------- #
# Wrappers
# --------------------------------------------------------------------------- #
def _pick_batch_tile(b, d, h, itemsize, target_bytes):
    """Largest batch tile whose x block stays under target_bytes (double-buffered
    by the pipeline). Returns either the full batch or a multiple of 128 so the
    lane-dense (1, BT) output block satisfies the (8, 128) constraints."""
    row_bytes = d * h * itemsize
    if b * row_bytes <= target_bytes:
        return b
    bt = (target_bytes // max(row_bytes, 1)) // _LANE * _LANE
    return max(_LANE, bt)


def _prep(x, goal, target_bytes):
    b, h, d = x.shape
    x_t = jnp.transpose(x, (0, 2, 1))                  # [B, D, H]  (lane axis = H)
    bt = _pick_batch_tile(b, d, h, x_t.dtype.itemsize, target_bytes)
    nblk = pl.cdiv(b, bt)
    b_pad = nblk * bt
    if b_pad != b:                                     # pad batch so BT divides it
        x_t = jnp.pad(x_t, ((0, b_pad - b), (0, 0), (0, 0)))
        goal = jnp.pad(goal, ((0, b_pad - b), (0, 0)))
    return x_t, goal, bt, nblk, b_pad


def _compiler_params():
    return pltpu.CompilerParams(
        dimension_semantics=("parallel",),
        vmem_limit_bytes=_VMEM_LIMIT,
    )


@functools.partial(jax.jit)
def _every_value_forward(x, goal):
    b = x.shape[0]
    x_t, goal_p, bt, nblk, b_pad = _prep(x, goal, target_bytes=6 << 20)
    d, h = x_t.shape[1], x_t.shape[2]
    out = pl.pallas_call(
        _value_kernel,
        out_shape=jax.ShapeDtypeStruct((1, b_pad), jnp.float32),
        grid_spec=pltpu.PrefetchScalarGridSpec(
            num_scalar_prefetch=0,
            grid=(nblk,),
            in_specs=[
                pl.BlockSpec((bt, d, h), lambda i: (i, 0, 0),
                             memory_space=pltpu.MemorySpace.VMEM),
                pl.BlockSpec((bt, d), lambda i: (i, 0),
                             memory_space=pltpu.MemorySpace.VMEM),
            ],
            out_specs=pl.BlockSpec((1, bt), lambda i: (0, i),
                                   memory_space=pltpu.MemorySpace.VMEM),
        ),
        compiler_params=_compiler_params(),
    )(x_t, goal_p)
    return out[0, :b]


@functools.partial(jax.jit)
def _every_value_and_grad(x, goal):
    b, h, d = x.shape
    # Smaller tile target: x and grad blocks are both double-buffered.
    x_t, goal_p, bt, nblk, b_pad = _prep(x, goal, target_bytes=3 << 20)
    out, grad_t = pl.pallas_call(
        _value_grad_kernel,
        out_shape=(
            jax.ShapeDtypeStruct((1, b_pad), jnp.float32),
            jax.ShapeDtypeStruct((b_pad, d, h), x.dtype),
        ),
        grid_spec=pltpu.PrefetchScalarGridSpec(
            num_scalar_prefetch=0,
            grid=(nblk,),
            in_specs=[
                pl.BlockSpec((bt, d, h), lambda i: (i, 0, 0),
                             memory_space=pltpu.MemorySpace.VMEM),
                pl.BlockSpec((bt, d), lambda i: (i, 0),
                             memory_space=pltpu.MemorySpace.VMEM),
            ],
            out_specs=[
                pl.BlockSpec((1, bt), lambda i: (0, i),
                             memory_space=pltpu.MemorySpace.VMEM),
                pl.BlockSpec((bt, d, h), lambda i: (i, 0, 0),
                             memory_space=pltpu.MemorySpace.VMEM),
            ],
        ),
        compiler_params=_compiler_params(),
    )(x_t, goal_p)
    y = out[0, :b]
    grad = jnp.transpose(grad_t, (0, 2, 1))[:b]        # back to [B, H, D]
    return y, grad


def _torch_squeeze_last(v):
    # torch .squeeze(dim=-1): squeeze only if that dim has size 1.
    return jnp.squeeze(v, axis=-1) if v.shape[-1] == 1 else v


class TrueValueGuideAntmaze:
    """JAX/Pallas port of diffuser.guides.policies.TrueValueGuideAntmaze."""

    def __init__(self, func_type, horizon):
        self.func_type = func_type
        self.horizon = horizon

    def __call__(self, x, cond, t):
        if self.func_type == 'every':
            goal_point = cond[self.horizon - 1]               # [B, D]
            row_score = _every_value_forward(x, goal_point)   # [B]
        elif self.func_type == 'last':
            # TODO(synk): 'last' branch hits breakpoint() in the reference and is
            # not an executable path; not ported.
            raise NotImplementedError("'last' branch not ported")
        else:
            raise ValueError(f"unknown func_type {self.func_type!r}")
        return _torch_squeeze_last(row_score)

    def gradients(self, x, cond, t):
        if self.func_type != 'every':
            raise NotImplementedError("'last' branch not ported")
        goal_point = cond[self.horizon - 1]
        # Fused single-pass kernel: returns (values [B], grad [B, H, D]).
        y, grad = _every_value_and_grad(x, goal_point)
        return _torch_squeeze_last(y), grad


# --------------------------------------------------------------------------- #
# Reference & test
# --------------------------------------------------------------------------- #
def _reference(x, goal):
    diff = x - goal[:, None, :]
    dist = -jnp.linalg.norm(diff, axis=-1)
    return jnp.exp(dist).sum(-1)


if __name__ == "__main__":
    key = jax.random.PRNGKey(0)
    B, H, D = 2, 8, 4                      # batch, horizon, transition dim
    k1, k2 = jax.random.split(key)
    x = jax.random.normal(k1, (B, H, D), dtype=jnp.float32)
    goal = jax.random.normal(k2, (B, D), dtype=jnp.float32)
    cond = {H - 1: goal}                   # diffuser-style cond dict
    t = jnp.zeros((B,), dtype=jnp.int32)   # unused, kept for signature parity

    guide = TrueValueGuideAntmaze('every', horizon=H)

    # Forward
    out = jax.block_until_ready(guide(x, cond, t))
    ref = _reference(x, goal)
    assert out.shape == (B,)
    assert jnp.allclose(out, ref, atol=1e-5, rtol=1e-5), (out, ref)

    # Fused value + analytic gradient
    y, grad = guide.gradients(x, cond, t)
    y, grad = jax.block_until_ready((y, grad))
    ref_y = _reference(x, goal)
    ref_grad = jax.grad(lambda xx: _reference(xx, goal).sum())(x)
    assert y.shape == (B,) and grad.shape == x.shape
    assert jnp.allclose(y, ref_y, atol=1e-5, rtol=1e-5), (y, ref_y)
    assert jnp.allclose(grad, ref_grad, atol=1e-5, rtol=1e-4), (grad, ref_grad)

    print("KERNEL_OK")
</pallas_src>

<mosaic_0001>
module attributes {stable_mosaic.version = 11 : i64} {
  func.func @_value_kernel(%arg0: i32, %arg1: memref<2x4x8xf32, #tpu.memory_space<vmem>>, %arg2: memref<2x4xf32, #tpu.memory_space<vmem>>, %arg3: memref<1x2xf32, #tpu.memory_space<vmem>>) attributes {dimension_semantics = [#tpu.dimension_semantics<parallel>], iteration_bounds = array<i64: 1>, scalar_prefetch = 0 : i64, scratch_operands = 0 : i64, tpu.core_type = #tpu.core_type<tc>, window_params = [{transform_indices = @transform_0, window_bounds = array<i64: 2, 4, 8>}, {transform_indices = @transform_1, window_bounds = array<i64: 2, 4>}, {transform_indices = @transform_2, window_bounds = array<i64: 1, 2>}]} {
    %c0 = arith.constant 0 : index
    %c0_0 = arith.constant 0 : index
    %0 = vector.load %arg2[%c0, %c0_0] : memref<2x4xf32, #tpu.memory_space<vmem>>, vector<2x4xf32>
    %cst = arith.constant 0.000000e+00 : f32
    %1 = vector.broadcast %cst : f32 to vector<2x8xf32>
    %c0_1 = arith.constant 0 : index
    %c0_2 = arith.constant 0 : index
    %c0_3 = arith.constant 0 : index
    %2 = vector.load %arg1[%c0_1, %c0_2, %c0_3] : memref<2x4x8xf32, #tpu.memory_space<vmem>>, vector<2x1x8xf32>
    %3 = vector.shape_cast %2 : vector<2x1x8xf32> to vector<2x8xf32>
    %4 = vector.extract_strided_slice %0 {offsets = [0, 0], sizes = [2, 1], strides = [1, 1]} : vector<2x4xf32> to vector<2x1xf32>
    %5 = vector.shape_cast %4 : vector<2x1xf32> to vector<2xf32>
    %6 = vector.shape_cast %5 : vector<2xf32> to vector<2x1xf32>
    %7 = vector.broadcast %6 : vector<2x1xf32> to vector<2x8xf32>
    %8 = arith.subf %3, %7 : vector<2x8xf32>
    %9 = arith.mulf %8, %8 : vector<2x8xf32>
    %10 = arith.addf %1, %9 : vector<2x8xf32>
    %c0_4 = arith.constant 0 : index
    %c1 = arith.constant 1 : index
    %c0_5 = arith.constant 0 : index
    %11 = vector.load %arg1[%c0_4, %c1, %c0_5] : memref<2x4x8xf32, #tpu.memory_space<vmem>>, vector<2x1x8xf32>
    %12 = vector.shape_cast %11 : vector<2x1x8xf32> to vector<2x8xf32>
    %13 = vector.extract_strided_slice %0 {offsets = [0, 1], sizes = [2, 1], strides = [1, 1]} : vector<2x4xf32> to vector<2x1xf32>
    %14 = vector.shape_cast %13 : vector<2x1xf32> to vector<2xf32>
    %15 = vector.shape_cast %14 : vector<2xf32> to vector<2x1xf32>
    %16 = vector.broadcast %15 : vector<2x1xf32> to vector<2x8xf32>
    %17 = arith.subf %12, %16 : vector<2x8xf32>
    %18 = arith.mulf %17, %17 : vector<2x8xf32>
    %19 = arith.addf %10, %18 : vector<2x8xf32>
    %c0_6 = arith.constant 0 : index
    %c2 = arith.constant 2 : index
    %c0_7 = arith.constant 0 : index
    %20 = vector.load %arg1[%c0_6, %c2, %c0_7] : memref<2x4x8xf32, #tpu.memory_space<vmem>>, vector<2x1x8xf32>
    %21 = vector.shape_cast %20 : vector<2x1x8xf32> to vector<2x8xf32>
    %22 = vector.extract_strided_slice %0 {offsets = [0, 2], sizes = [2, 1], strides = [1, 1]} : vector<2x4xf32> to vector<2x1xf32>
    %23 = vector.shape_cast %22 : vector<2x1xf32> to vector<2xf32>
    %24 = vector.shape_cast %23 : vector<2xf32> to vector<2x1xf32>
    %25 = vector.broadcast %24 : vector<2x1xf32> to vector<2x8xf32>
    %26 = arith.subf %21, %25 : vector<2x8xf32>
    %27 = arith.mulf %26, %26 : vector<2x8xf32>
    %28 = arith.addf %19, %27 : vector<2x8xf32>
    %c0_8 = arith.constant 0 : index
    %c3 = arith.constant 3 : index
    %c0_9 = arith.constant 0 : index
    %29 = vector.load %arg1[%c0_8, %c3, %c0_9] : memref<2x4x8xf32, #tpu.memory_space<vmem>>, vector<2x1x8xf32>
    %30 = vector.shape_cast %29 : vector<2x1x8xf32> to vector<2x8xf32>
    %31 = vector.extract_strided_slice %0 {offsets = [0, 3], sizes = [2, 1], strides = [1, 1]} : vector<2x4xf32> to vector<2x1xf32>
    %32 = vector.shape_cast %31 : vector<2x1xf32> to vector<2xf32>
    %33 = vector.shape_cast %32 : vector<2xf32> to vector<2x1xf32>
    %34 = vector.broadcast %33 : vector<2x1xf32> to vector<2x8xf32>
    %35 = arith.subf %30, %34 : vector<2x8xf32>
    %36 = arith.mulf %35, %35 : vector<2x8xf32>
    %37 = arith.addf %28, %36 : vector<2x8xf32>
    %38 = math.sqrt %37 : vector<2x8xf32>
    %cst_10 = arith.constant 0.000000e+00 : f32
    %39 = vector.broadcast %cst_10 : f32 to vector<2x8xf32>
    %40 = arith.subf %39, %38 : vector<2x8xf32>
    %41 = math.exp %40 : vector<2x8xf32>
    %cst_11 = arith.constant dense<0.000000e+00> : vector<2xf32>
    %42 = vector.multi_reduction <add>, %41, %cst_11 [1] : vector<2x8xf32> to vector<2xf32>
    %43 = vector.shape_cast %42 : vector<2xf32> to vector<1x2xf32>
    %c0_12 = arith.constant 0 : index
    %c0_13 = arith.constant 0 : index
    %44 = vector.load %arg3[%c0_12, %c0_13] : memref<1x2xf32, #tpu.memory_space<vmem>>, vector<1x2xf32>
    tpu.vector_store %arg3[%c0_12, %c0_13], %43 {strides = array<i32>} : memref<1x2xf32, #tpu.memory_space<vmem>>, vector<1x2xf32>,
    return
  }
  func.func @transform_0(%arg0: i32) -> (i32, i32, i32) {
    %c0_i32 = arith.constant 0 : i32
    %c0_i32_0 = arith.constant 0 : i32
    %c0_i32_1 = arith.constant 0 : i32
    return %arg0, %c0_i32, %c0_i32_0 : i32, i32, i32
  }
  func.func @transform_1(%arg0: i32) -> (i32, i32) {
    %c0_i32 = arith.constant 0 : i32
    %c0_i32_0 = arith.constant 0 : i32
    return %arg0, %c0_i32 : i32, i32
  }
  func.func @transform_2(%arg0: i32) -> (i32, i32) {
    %c0_i32 = arith.constant 0 : i32
    %c0_i32_0 = arith.constant 0 : i32
    return %c0_i32, %arg0 : i32, i32
  }
}

</mosaic_0001>

<llo_original>
// kernel: _every_value_forward.1
$region0: #{_every_value_forward.1}
  #allocation0 [shape = 'u32[]', space=smem, size = 0x4, offset = 0x4, fixed_abs, tag = 'smem constant byte address 0x4 - core index']
  #allocation1 [shape = 'u32[72,128]{1,0:T(1,128)}', space=vmem, size = 0x9000, scoped, tag = 'internal scratch']
  %s0 = inlined_call_operand.hbm [shape: f32[2,4,8], index: 0, kind: input, shape index: {}]
  %s1 = inlined_call_operand.hbm [shape: f32[2,4], index: 1, kind: input, shape index: {}]
  %s2 = inlined_call_operand.hbm [shape: f32[1,2], index: 2, kind: output, shape index: {}]
  %s3 = sld [smem:[#allocation0]]
  $region26: #{_every_value_forward.1} parent=0
    _
  %s5 = ssub.s32 1, %s3
  %s6 = scalar_select 0, %s5, %s3
  $region1: #{_every_value_forward.1} parent=0
    #allocation2 [shape = 'u8[4096]{0}', space=vmem, size = 0x1000, scoped, tag = 'input window, operand 0, single buffered']
    #allocation3 [shape = 's32[1]{0}', space=sflag, size = 0x4, scoped, tag = 'scoped memory for _every_value_forward.1']
    #allocation4 [shape = 's32[1]{0}', space=sflag, size = 0x4, scoped, tag = 'scoped memory for _every_value_forward.1']
    #allocation5 [shape = 'u8[1024]{0}', space=vmem, size = 0x400, scoped, tag = 'input window, operand 1, single buffered']
    #allocation6 [shape = 's32[1]{0}', space=sflag, size = 0x4, scoped, tag = 'scoped memory for _every_value_forward.1']
    #allocation7 [shape = 'u8[512]{0}', space=vmem, size = 0x400, scoped, tag = 'output window, operand 0, single buffered']
    %7 = vsyncpa [#allocation3], 0
    %8 = vsyncpa [#allocation6], 0
    %9 = vsyncpa [#allocation4], 0
    // Predicated region
    $region2: #{_every_value_forward.1} parent=1 // pred_check
      _
    $region3: #{_every_value_forward.1} parent=1 // pred_check_branch
      %11 = sbr.rel (0) target = $region5
    $region4: #{_every_value_forward.1} parent=1 // pred_region
      %13 = vsyncadd [#allocation3], 0
      %s14 = sshll.u32 %s0, 4
      %s15 = int_to_ptr.hbm [resolvable:$true] %s14
      %s16 = sshll.u32 [#allocation2], 4
      %s17 = int_to_ptr.vmem [resolvable:$true] %s16
      %22 = dma.hbm_to_vmem [thread:$0]  %s15, 128, %s17, [#allocation3], 64, 64, 4
    $region5: #{_every_value_forward.1} parent=1 // pred_fallthru
      _
    // Predicated region
    $region6: #{_every_value_forward.1} parent=1 // pred_check
      _
    $region7: #{_every_value_forward.1} parent=1 // pred_check_branch
      %24 = sbr.rel (0) target = $region9
    $region8: #{_every_value_forward.1} parent=1 // pred_region
      %26 = vsyncadd [#allocation6], 0
      %s28 = sshll.u32 %s1, 4
      %s29 = int_to_ptr.hbm [resolvable:$true] %s28
      %s30 = sshll.u32 [#allocation5], 4
      %s31 = int_to_ptr.vmem [resolvable:$true] %s30
      %33 = dma.hbm_to_vmem [thread:$0]  %s29, 32, %s31, [#allocation6]
    $region9: #{_every_value_forward.1} parent=1 // pred_fallthru
      _
    // Predicated region
    $region10: #{_every_value_forward.1} parent=1 // pred_check
      _
    $region11: #{_every_value_forward.1} parent=1 // pred_check_branch
      %35 = sbr.rel (0) target = $region13
    $region12: #{_every_value_forward.1} parent=1 // pred_region
      %37 = dma.done [#allocation3], 128
    $region13: #{_every_value_forward.1} parent=1 // pred_fallthru
      _
    // Predicated region
    $region14: #{_every_value_forward.1} parent=1 // pred_check
      _
    $region15: #{_every_value_forward.1} parent=1 // pred_check_branch
      %39 = sbr.rel (0) target = $region17
    $region16: #{_every_value_forward.1} parent=1 // pred_region
      %41 = dma.done [#allocation6], 32
    $region17: #{_every_value_forward.1} parent=1 // pred_fallthru
      _
    %v42 = vld [vmem:[#allocation5] sm:$0x3]
    %v43 = vld [vmem:[#allocation2] sm:$0x1]
    %v44 = vld [vmem:[#allocation2 + $0x4] sm:$0x1]
    %46 = vset.pattern.permute.xlu0 0
    %47 = vperm.xlu0 %46, %v42
    %v48 = vpop.permute.xlu0 %47
    %v49 = vrot.slane %v48, 1
    %v52 = vsub.f32 %v43, %v48
    %v53 = vsub.f32 %v44, %v49
    %v54 = vmul.f32 %v52, %v52
    %v55 = vmul.f32 %v53, %v53
    %v56 = vadd.f32 %v54, 0.0
    %v57 = vadd.f32 %v55, 0.0
    %v58 = vld [vmem:[#allocation2 + $0x1] sm:$0x1]
    %v59 = vld [vmem:[#allocation2 + $0x5] sm:$0x1]
    %60 = vset.pattern.permute.xlu0 1
    %61 = vperm.xlu0 %60, %v42
    %v62 = vpop.permute.xlu0 %61
    %v63 = vrot.slane %v62, 1
    %v66 = vsub.f32 %v58, %v62
    %v67 = vsub.f32 %v59, %v63
    %v68 = vmul.f32 %v66, %v66
    %v69 = vmul.f32 %v67, %v67
    %v70 = vadd.f32 %v56, %v68
    %v71 = vadd.f32 %v57, %v69
    %v72 = vld [vmem:[#allocation2 + $0x2] sm:$0x1]
    %v73 = vld [vmem:[#allocation2 + $0x6] sm:$0x1]
    %74 = vset.pattern.permute.xlu0 2
    %75 = vperm.xlu0 %74, %v42
    %v76 = vpop.permute.xlu0 %75
    %v77 = vrot.slane %v76, 1
    %v80 = vsub.f32 %v72, %v76
    %v81 = vsub.f32 %v73, %v77
    %v82 = vmul.f32 %v80, %v80
    %v83 = vmul.f32 %v81, %v81
    %v84 = vadd.f32 %v70, %v82
    %v85 = vadd.f32 %v71, %v83
    %v86 = vld [vmem:[#allocation2 + $0x3] sm:$0x1]
    %v87 = vld [vmem:[#allocation2 + $0x7] sm:$0x1]
    %88 = vset.pattern.permute.xlu0 3
    %89 = vperm.xlu0 %88, %v42
    %v90 = vpop.permute.xlu0 %89
    %v91 = vrot.slane %v90, 1
    %v94 = vsub.f32 %v86, %v90
    %v95 = vsub.f32 %v87, %v91
    %v96 = vmul.f32 %v94, %v94
    %v97 = vmul.f32 %v95, %v95
    %v98 = vadd.f32 %v84, %v96
    %v99 = vadd.f32 %v85, %v97
    %v100 = vrsqrt.pop %v98
    %v101 = vmul.f32 %v100, %v98
    %v102 = vmul.f32 %v101, %v100
    %v103 = vmul.f32 0.5, %v102
    %v104 = vsub.f32 1.5, %v103
    %v105 = vmul.f32 %v100, %v104
    %v106 = vmul.f32 %v98, %v105
    %vm107 = vcmp.eq.f32.partialorder %v98, inf
    %v108 = vsel %vm107, %v98, %v106
    %vm109 = vcmp.eq.f32.partialorder %v98, 0.0
    %v110 = vand.u32 %v98, 2147483648
    %v111 = vsel %vm109, %v110, %v108
    %v112 = vrsqrt.pop %v99
    %v113 = vmul.f32 %v112, %v99
    %v114 = vmul.f32 %v113, %v112
    %v115 = vmul.f32 0.5, %v114
    %v116 = vsub.f32 1.5, %v115
    %v117 = vmul.f32 %v112, %v116
    %v118 = vmul.f32 %v99, %v117
    %vm119 = vcmp.eq.f32.partialorder %v99, inf
    %v120 = vsel %vm119, %v99, %v118
    %vm121 = vcmp.eq.f32.partialorder %v99, 0.0
    %v122 = vand.u32 %v99, 2147483648
    %v123 = vsel %vm121, %v122, %v120
    %v124 = vsub.f32 0.0, %v111
    %v125 = vsub.f32 0.0, %v123
    %v126 = vmul.f32 %v124, 1.442695
    %v127 = vpow.pop %v126
    %v128 = vmul.f32 %v125, 1.442695
    %v129 = vpow.pop %v128
    %v132 = vrot.slane %v129, 7
    %vm133 = vcmask 1041409
    %v134 = vsel %vm133, %v132, %v127
    %vm136 = vcmask 58368
    %v137 = vsel %vm136, %v134, 0.0
    %138 = vadd.xlane.f32.xlu0 %v137
    %v139 = vpop.xlane.xlu0 %138
    %v141 = vlaneseq
    %v142 = vand.u32 %v141, 127
    %v143 = vperm.slane %v139, %v142
    %vm145 = vcmask 8192
    %146 = vst.msk [vmem:[#allocation7] sm:$0x1] %vm145, %v143
    // Predicated region
    $region18: #{_every_value_forward.1} parent=1 // pred_check
      _
    $region19: #{_every_value_forward.1} parent=1 // pred_check_branch
      %148 = sbr.rel (0) target = $region21
    $region20: #{_every_value_forward.1} parent=1 // pred_region
      %150 = vsyncadd [#allocation4], 0
      %s152 = sshll.u32 [#allocation7], 4
      %s153 = int_to_ptr.vmem [resolvable:$true] %s152
      %s154 = sshll.u32 %s2, 4
      %s155 = int_to_ptr.hbm [resolvable:$true] %s154
      %157 = dma.vmem_to_hbm [thread:$0]  %s153, 16, %s155, [#allocation4]
    $region21: #{_every_value_forward.1} parent=1 // pred_fallthru
      _
    // Predicated region
    $region22: #{_every_value_forward.1} parent=1 // pred_check
      _
    $region23: #{_every_value_forward.1} parent=1 // pred_check_branch
      %159 = sbr.rel (0) target = $region25
    $region24: #{_every_value_forward.1} parent=1 // pred_region
      %161 = dma.done [#allocation4], 16
    $region25: #{_every_value_forward.1} parent=1 // pred_fallthru
      _
    %162 = vsyncpa [#allocation3], 1
    %163 = vsyncpa [#allocation6], 1
    %164 = vsyncpa [#allocation4], 1

</llo_original>
